<compile_context>
chip_gen: v7x
topology: tpu7x:2x2x1
jax: 0.10.0
libtpu: 0.0.40
codegen_flags: <defaults>
</compile_context>

<pallas_src>
import jax
import jax.numpy as jnp
from jax.experimental import pallas as pl
from jax.experimental.pallas import tpu as pltpu


# ----------------------------------------------------------------------------
# Pallas kernel: (C, T) channel-mix gated attention on lane-dense pixel tiles
# ----------------------------------------------------------------------------
def _gated_attention_kernel(
    xc_ref,    # (1, C, T)  X_c tile (channels on sublanes, pixels on lanes)
    xf_ref,    # (1, C, T)  X_f tile
    wg_ref,    # (C, C)     folded W_g weight (out, in)
    wx_ref,    # (C, C)     folded W_x weight
    bgx_ref,   # (C, 1)     folded W_g bias + W_x bias
    wpsi_ref,  # (C, 1)     folded psi conv weight (as a column)
    bpsi_ref,  # (1, 1)     folded psi bias
    wc1_ref,   # (C, C)     folded final conv weight acting on X_c
    wc2_ref,   # (C, C)     folded final conv weight acting on X_f * psi
    bc_ref,    # (C, 1)     folded final conv bias
    out_ref,   # (1, C, T)  output tile
    psi_ref,   # (1, 1, T)  attention-map tile
):
    xc = xc_ref[0]                                        # (C, T), native dtype
    xf = xf_ref[0]                                        # (C, T)

    # relu(W_g X_c + W_x X_f + b): two accumulated MXU dots, f32 accumulation,
    # no (2C, T) concat copy and no f32 upcast of the streamed tiles.
    pre = jnp.dot(wg_ref[...], xc, preferred_element_type=jnp.float32)
    pre = pre + jnp.dot(wx_ref[...], xf, preferred_element_type=jnp.float32)
    pre = jnp.maximum(pre + bgx_ref[...], 0.0)            # (C, T) f32

    # psi = sigmoid(w_psi . pre + b_psi): weighted sublane reduction (XLU) ->
    # a dense (1, T) lane row; sigmoid runs on the EUP.
    psi_logit = jnp.sum(wpsi_ref[...] * pre, axis=0, keepdims=True) + bpsi_ref[...]
    psi = jax.nn.sigmoid(psi_logit)                       # (1, T) f32

    # out = relu(W_c1 X_c + W_c2 (X_f * psi) + b_c); again no concat copy.
    out = jnp.dot(wc1_ref[...], xc, preferred_element_type=jnp.float32)
    xf_gated = (xf.astype(jnp.float32) * psi).astype(xf.dtype)
    out = out + jnp.dot(wc2_ref[...], xf_gated, preferred_element_type=jnp.float32)
    out = jnp.maximum(out + bc_ref[...], 0.0)

    out_ref[0] = out.astype(out_ref.dtype)
    psi_ref[0] = psi.astype(psi_ref.dtype)


# ----------------------------------------------------------------------------
# BN folding, tile / VMEM sizing helpers
# ----------------------------------------------------------------------------
def _fold_bn(w, b, gamma, beta, mean, var, eps=1e-5):
    """Fold eval-mode BatchNorm into a preceding 1x1 conv.

    w: (C_out, C_in) conv weight, b: (C_out,) conv bias.
    Returns (w_f, b_f) so that y = w_f @ x + b_f per pixel (float32).
    """
    scale = gamma / jnp.sqrt(var + eps)
    w_f = (w * scale[:, None]).astype(jnp.float32)
    b_f = ((b - mean) * scale + beta).astype(jnp.float32)
    return w_f, b_f


def _tile_budget_per_lane(channels, itemsize):
    """VMEM bytes needed per pixel lane: double-buffered streamed tiles
    (xc, xf, out, psi) plus the f32 in-kernel intermediates."""
    act = max(int(itemsize), 2)
    streamed = 2 * (3 * channels + 1) * act               # 2 pipeline buffers each
    interm = (3 * channels + 2) * 4                       # pre, f32 out, gated xf, psi
    return streamed + interm


def _pick_tile_hw(hw, channels, itemsize, n_batch, budget=24 * 1024 * 1024):
    """Pixel-tile size: big enough to hide the ~0.35us per-step overhead,
    small enough to stay well inside VMEM on every generation (v7x: 64 MiB)."""
    per_lane = _tile_budget_per_lane(channels, itemsize)
    t = (budget // per_lane) // 128 * 128
    t = max(128, min(2048, t))        # HBM roofline saturates well below 2k lanes
    if hw <= t:
        t = hw
    # Keep the number of parallel grid steps even where cheap so the two
    # TensorCores of a v7x chip stay balanced (no effect on v5e/v6e).
    tiles = -(-hw // t)
    if (n_batch * tiles) % 2 == 1 and hw > 256 and t > 128:
        cand = ((-(-hw // (tiles + 1)) + 127) // 128) * 128
        if cand >= 128 and (n_batch * (-(-hw // cand))) % 2 == 0:
            t = cand
    return t


def _vmem_limit_bytes(tile_hw, channels, itemsize):
    act = max(int(itemsize), 2)
    tiles = _tile_budget_per_lane(channels, itemsize) * tile_hw
    # 4 (C, C) matmul weights + small bias columns, double-buffered by the
    # pipeline (their index_map is constant, so they are DMA'd only once).
    weights = 2 * (4 * channels * channels * act + 4 * (3 * channels + 1))
    total = tiles + weights
    return int(max(32 << 20, min(int(total * 1.5) + (4 << 20), 48 << 20)))


# ----------------------------------------------------------------------------
# Wrapper: NCHW -> (N, C, HW) view, BN folding, tile sizing, pallas_call
# ----------------------------------------------------------------------------
def gated_attention_forward(x_c, x_f, params, *, tile_hw=None, out_dtype=None):
    """x_c, x_f: (N, C, H, W).  Returns (out (N, C, H, W), psi (N, 1, H, W))."""
    N, C, H, W = x_c.shape
    HW = H * W
    out_dtype = x_c.dtype if out_dtype is None else out_dtype
    act_dtype = x_c.dtype

    # NCHW is already channel-major / pixel-minor: just flatten the spatial
    # dims.  No transpose, no pad, no dtype-cast copies in HBM.
    xc3 = x_c.reshape(N, C, HW)
    xf3 = x_f.reshape(N, C, HW).astype(act_dtype)

    # Fold the eval-mode BatchNorms into the 1x1 convs.
    wg, bg = _fold_bn(params["wg"], params["bg"], *params["bn_g"])
    wx, bx = _fold_bn(params["wx"], params["bx"], *params["bn_x"])
    wpsi, bpsi = _fold_bn(params["wpsi"], params["bpsi"], *params["bn_psi"])
    wc, bc = _fold_bn(params["wc"], params["bc"], *params["bn_c"])

    # MXU weights in the activation dtype (bf16 activations stay bf16 all the
    # way to the MXU; accumulation is f32).  psi / bias math stays f32.
    w_g = wg.astype(act_dtype)                            # (C, C)
    w_x = wx.astype(act_dtype)                            # (C, C)
    w_c1 = wc[:, :C].astype(act_dtype)                    # (C, C) acts on X_c
    w_c2 = wc[:, C:].astype(act_dtype)                    # (C, C) acts on X_f * psi
    b_gx = (bg + bx).reshape(C, 1)                        # g1 + x1 biases fold together
    w_psi = wpsi.reshape(C, 1)
    b_psi = bpsi.reshape(1, 1)
    b_c = bc.reshape(C, 1)

    itemsize = jnp.dtype(act_dtype).itemsize
    if tile_hw is None:
        T = _pick_tile_hw(HW, C, itemsize, N)
    else:
        T = min(int(tile_hw), HW)
        if T != HW and T % 128 != 0:
            raise ValueError("tile_hw must be a multiple of 128 or >= H*W")

    grid = (N, pl.cdiv(HW, T))                            # edge blocks: OOB lanes read
                                                          # garbage, writes are masked;
                                                          # math is per-pixel so safe.
    pix_spec = lambda c: pl.BlockSpec((1, c, T), lambda n, i: (n, 0, i))
    full2d = lambda arr: pl.BlockSpec(arr.shape, lambda n, i: (0, 0))
    # TODO(synk): weights have a constant index_map (DMA'd once) yet still get
    # the default 2 pipeline buffers; pipeline_mode=pl.Buffered(1) would save a
    # few MiB of VMEM at very large C (skipped here for portability).

    out3, psi3 = pl.pallas_call(
        _gated_attention_kernel,
        out_shape=(
            jax.ShapeDtypeStruct((N, C, HW), out_dtype),
            jax.ShapeDtypeStruct((N, 1, HW), out_dtype),
        ),
        grid_spec=pltpu.PrefetchScalarGridSpec(
            num_scalar_prefetch=0,
            grid=grid,
            in_specs=[
                pix_spec(C),        # xc
                pix_spec(C),        # xf
                full2d(w_g),
                full2d(w_x),
                full2d(b_gx),
                full2d(w_psi),
                full2d(b_psi),
                full2d(w_c1),
                full2d(w_c2),
                full2d(b_c),
            ],
            out_specs=[
                pix_spec(C),        # out
                pix_spec(1),        # psi
            ],
        ),
        compiler_params=pltpu.CompilerParams(
            dimension_semantics=("parallel", "parallel"),
            vmem_limit_bytes=_vmem_limit_bytes(T, C, itemsize),
        ),
    )(xc3, xf3, w_g, w_x, b_gx, w_psi, b_psi, w_c1, w_c2, b_c)

    return out3.reshape(N, C, H, W), psi3.reshape(N, 1, H, W)


# ----------------------------------------------------------------------------
# Pure-JAX reference (same math, no Pallas) for a correctness check
# ----------------------------------------------------------------------------
def gated_attention_reference(x_c, x_f, params):
    N, C, H, W = x_c.shape
    xc = x_c.reshape(N, C, H * W).astype(jnp.float32)
    xf = x_f.reshape(N, C, H * W).astype(jnp.float32)

    wg, bg = _fold_bn(params["wg"], params["bg"], *params["bn_g"])
    wx, bx = _fold_bn(params["wx"], params["bx"], *params["bn_x"])
    wpsi, bpsi = _fold_bn(params["wpsi"], params["bpsi"], *params["bn_psi"])
    wc, bc = _fold_bn(params["wc"], params["bc"], *params["bn_c"])

    hi = jax.lax.Precision.HIGHEST
    g1 = jnp.einsum("oc,ncp->nop", wg, xc, precision=hi) + bg[None, :, None]
    x1 = jnp.einsum("oc,ncp->nop", wx, xf, precision=hi) + bx[None, :, None]
    pre = jnp.maximum(g1 + x1, 0.0)
    psi = jax.nn.sigmoid(
        jnp.einsum("oc,ncp->nop", wpsi, pre, precision=hi) + bpsi[None, :, None])
    cat = jnp.concatenate([xc, xf * psi], axis=1)
    out = jnp.maximum(
        jnp.einsum("oc,ncp->nop", wc, cat, precision=hi) + bc[None, :, None], 0.0)
    return out.reshape(N, C, H, W), psi.reshape(N, 1, H, W)


# ----------------------------------------------------------------------------
# Deterministic parameter construction (shapes from the PyTorch __init__)
# ----------------------------------------------------------------------------
def make_params(key, channels):
    C = channels
    ks = jax.random.split(key, 12)

    def conv(kw, kb, c_out, c_in):
        w = jax.random.normal(kw, (c_out, c_in), jnp.float32) * 0.2
        b = jax.random.normal(kb, (c_out,), jnp.float32) * 0.1
        return w, b

    def bn(k, c):
        kg, kb, km, kv = jax.random.split(k, 4)
        gamma = 1.0 + 0.1 * jax.random.normal(kg, (c,), jnp.float32)
        beta = 0.1 * jax.random.normal(kb, (c,), jnp.float32)
        mean = 0.1 * jax.random.normal(km, (c,), jnp.float32)
        var = 0.5 + jax.random.uniform(kv, (c,), jnp.float32)   # positive
        return (gamma, beta, mean, var)

    wg, bg = conv(ks[0], ks[1], C, C)
    wx, bx = conv(ks[2], ks[3], C, C)
    wpsi, bpsi = conv(ks[4], ks[5], 1, C)
    wc, bc = conv(ks[6], ks[7], C, 2 * C)

    return {
        "wg": wg, "bg": bg, "bn_g": bn(ks[8], C),
        "wx": wx, "bx": bx, "bn_x": bn(ks[9], C),
        "wpsi": wpsi, "bpsi": bpsi, "bn_psi": bn(ks[10], 1),
        "wc": wc, "bc": bc, "bn_c": bn(ks[11], C),
    }


if __name__ == "__main__":
    key = jax.random.PRNGKey(0)
    k_xc, k_xf, k_p = jax.random.split(key, 3)

    N, C, H, W = 2, 8, 16, 16   # small shapes consistent with the module
    x_c = jax.random.normal(k_xc, (N, C, H, W), jnp.float32)
    x_f = jax.random.normal(k_xf, (N, C, H, W), jnp.float32)
    params = make_params(k_p, C)

    fwd = jax.jit(gated_attention_forward)
    out, psi = fwd(x_c, x_f, params)
    out, psi = jax.block_until_ready((out, psi))

    out_ref, psi_ref = gated_attention_reference(x_c, x_f, params)
    assert out.shape == (N, C, H, W) and psi.shape == (N, 1, H, W)
    assert jnp.allclose(out, out_ref, atol=1e-3, rtol=1e-3), float(
        jnp.max(jnp.abs(out - out_ref)))
    assert jnp.allclose(psi, psi_ref, atol=1e-3, rtol=1e-3), float(
        jnp.max(jnp.abs(psi - psi_ref)))

    print("KERNEL_OK")
</pallas_src>

<mosaic_0001>
module attributes {stable_mosaic.version = 11 : i64} {
  func.func @_gated_attention_kernel(%arg0: i32, %arg1: i32, %arg2: memref<1x8x256xf32, #tpu.memory_space<vmem>>, %arg3: memref<1x8x256xf32, #tpu.memory_space<vmem>>, %arg4: memref<8x8xf32, #tpu.memory_space<vmem>>, %arg5: memref<8x8xf32, #tpu.memory_space<vmem>>, %arg6: memref<8x1xf32, #tpu.memory_space<vmem>>, %arg7: memref<8x1xf32, #tpu.memory_space<vmem>>, %arg8: memref<1x1xf32, #tpu.memory_space<vmem>>, %arg9: memref<8x8xf32, #tpu.memory_space<vmem>>, %arg10: memref<8x8xf32, #tpu.memory_space<vmem>>, %arg11: memref<8x1xf32, #tpu.memory_space<vmem>>, %arg12: memref<1x8x256xf32, #tpu.memory_space<vmem>>, %arg13: memref<1x1x256xf32, #tpu.memory_space<vmem>>) attributes {dimension_semantics = [#tpu.dimension_semantics<parallel>, #tpu.dimension_semantics<parallel>], iteration_bounds = array<i64: 2, 1>, scalar_prefetch = 0 : i64, scratch_operands = 0 : i64, tpu.core_type = #tpu.core_type<tc>, window_params = [{transform_indices = @transform_0, window_bounds = array<i64: 1, 8, 256>}, {transform_indices = @transform_1, window_bounds = array<i64: 1, 8, 256>}, {pipeline_mode = #tpu.pipeline_mode<synchronous>, transform_indices = @transform_2, window_bounds = array<i64: 8, 8>}, {pipeline_mode = #tpu.pipeline_mode<synchronous>, transform_indices = @transform_3, window_bounds = array<i64: 8, 8>}, {pipeline_mode = #tpu.pipeline_mode<synchronous>, transform_indices = @transform_4, window_bounds = array<i64: 8, 1>}, {pipeline_mode = #tpu.pipeline_mode<synchronous>, transform_indices = @transform_5, window_bounds = array<i64: 8, 1>}, {pipeline_mode = #tpu.pipeline_mode<synchronous>, transform_indices = @transform_6, window_bounds = array<i64: 1, 1>}, {pipeline_mode = #tpu.pipeline_mode<synchronous>, transform_indices = @transform_7, window_bounds = array<i64: 8, 8>}, {pipeline_mode = #tpu.pipeline_mode<synchronous>, transform_indices = @transform_8, window_bounds = array<i64: 8, 8>}, {pipeline_mode = #tpu.pipeline_mode<synchronous>, transform_indices = @transform_9, window_bounds = array<i64: 8, 1>}, {transform_indices = @transform_10, window_bounds = array<i64: 1, 8, 256>}, {transform_indices = @transform_11, window_bounds = array<i64: 1, 1, 256>}]} {
    %c0 = arith.constant 0 : index
    %c0_0 = arith.constant 0 : index
    %c0_1 = arith.constant 0 : index
    %0 = vector.load %arg2[%c0, %c0_0, %c0_1] : memref<1x8x256xf32, #tpu.memory_space<vmem>>, vector<1x8x256xf32>
    %1 = vector.shape_cast %0 : vector<1x8x256xf32> to vector<8x256xf32>
    %c0_2 = arith.constant 0 : index
    %c0_3 = arith.constant 0 : index
    %c0_4 = arith.constant 0 : index
    %2 = vector.load %arg3[%c0_2, %c0_3, %c0_4] : memref<1x8x256xf32, #tpu.memory_space<vmem>>, vector<1x8x256xf32>
    %3 = vector.shape_cast %2 : vector<1x8x256xf32> to vector<8x256xf32>
    %c0_5 = arith.constant 0 : index
    %c0_6 = arith.constant 0 : index
    %4 = vector.load %arg4[%c0_5, %c0_6] : memref<8x8xf32, #tpu.memory_space<vmem>>, vector<8x8xf32>
    %cst = arith.constant dense<0.000000e+00> : vector<8x256xf32>
    %5 = tpu.matmul %4, %1, %cst {dimension_numbers = #tpu.dot_dimension_numbers<[1], [0], [0], [1], [0, 0, 1, 1], [], []>} : vector<8x8xf32>, vector<8x256xf32>, vector<8x256xf32> -> vector<8x256xf32>
    %c0_7 = arith.constant 0 : index
    %c0_8 = arith.constant 0 : index
    %6 = vector.load %arg5[%c0_7, %c0_8] : memref<8x8xf32, #tpu.memory_space<vmem>>, vector<8x8xf32>
    %cst_9 = arith.constant dense<0.000000e+00> : vector<8x256xf32>
    %7 = tpu.matmul %6, %3, %cst_9 {dimension_numbers = #tpu.dot_dimension_numbers<[1], [0], [0], [1], [0, 0, 1, 1], [], []>} : vector<8x8xf32>, vector<8x256xf32>, vector<8x256xf32> -> vector<8x256xf32>
    %8 = arith.addf %5, %7 : vector<8x256xf32>
    %c0_10 = arith.constant 0 : index
    %c0_11 = arith.constant 0 : index
    %9 = vector.load %arg6[%c0_10, %c0_11] : memref<8x1xf32, #tpu.memory_space<vmem>>, vector<8x1xf32>
    %10 = vector.broadcast %9 : vector<8x1xf32> to vector<8x256xf32>
    %11 = arith.addf %8, %10 : vector<8x256xf32>
    %cst_12 = arith.constant 0.000000e+00 : f32
    %12 = vector.broadcast %cst_12 : f32 to vector<8x256xf32>
    %13 = arith.maximumf %11, %12 : vector<8x256xf32>
    %c0_13 = arith.constant 0 : index
    %c0_14 = arith.constant 0 : index
    %14 = vector.load %arg7[%c0_13, %c0_14] : memref<8x1xf32, #tpu.memory_space<vmem>>, vector<8x1xf32>
    %15 = vector.broadcast %14 : vector<8x1xf32> to vector<8x256xf32>
    %16 = arith.mulf %15, %13 : vector<8x256xf32>
    %cst_15 = arith.constant dense<0.000000e+00> : vector<256xf32>
    %17 = vector.multi_reduction <add>, %16, %cst_15 [0] : vector<8x256xf32> to vector<256xf32>
    %18 = vector.shape_cast %17 : vector<256xf32> to vector<1x256xf32>
    %c0_16 = arith.constant 0 : index
    %c0_17 = arith.constant 0 : index
    %19 = vector.load %arg8[%c0_16, %c0_17] : memref<1x1xf32, #tpu.memory_space<vmem>>, vector<1x1xf32>
    %20 = vector.broadcast %19 : vector<1x1xf32> to vector<1x256xf32>
    %21 = arith.addf %18, %20 : vector<1x256xf32>
    %22 = arith.negf %21 : vector<1x256xf32>
    %23 = math.exp %22 : vector<1x256xf32>
    %cst_18 = arith.constant 1.000000e+00 : f32
    %24 = vector.broadcast %cst_18 : f32 to vector<1x256xf32>
    %25 = arith.addf %24, %23 : vector<1x256xf32>
    %26 = arith.divf %24, %25 : vector<1x256xf32>
    %c0_19 = arith.constant 0 : index
    %c0_20 = arith.constant 0 : index
    %27 = vector.load %arg9[%c0_19, %c0_20] : memref<8x8xf32, #tpu.memory_space<vmem>>, vector<8x8xf32>
    %cst_21 = arith.constant dense<0.000000e+00> : vector<8x256xf32>
    %28 = tpu.matmul %27, %1, %cst_21 {dimension_numbers = #tpu.dot_dimension_numbers<[1], [0], [0], [1], [0, 0, 1, 1], [], []>} : vector<8x8xf32>, vector<8x256xf32>, vector<8x256xf32> -> vector<8x256xf32>
    %29 = vector.broadcast %26 : vector<1x256xf32> to vector<8x256xf32>
    %30 = arith.mulf %3, %29 : vector<8x256xf32>
    %c0_22 = arith.constant 0 : index
    %c0_23 = arith.constant 0 : index
    %31 = vector.load %arg10[%c0_22, %c0_23] : memref<8x8xf32, #tpu.memory_space<vmem>>, vector<8x8xf32>
    %cst_24 = arith.constant dense<0.000000e+00> : vector<8x256xf32>
    %32 = tpu.matmul %31, %30, %cst_24 {dimension_numbers = #tpu.dot_dimension_numbers<[1], [0], [0], [1], [0, 0, 1, 1], [], []>} : vector<8x8xf32>, vector<8x256xf32>, vector<8x256xf32> -> vector<8x256xf32>
    %33 = arith.addf %28, %32 : vector<8x256xf32>
    %c0_25 = arith.constant 0 : index
    %c0_26 = arith.constant 0 : index
    %34 = vector.load %arg11[%c0_25, %c0_26] : memref<8x1xf32, #tpu.memory_space<vmem>>, vector<8x1xf32>
    %35 = vector.broadcast %34 : vector<8x1xf32> to vector<8x256xf32>
    %36 = arith.addf %33, %35 : vector<8x256xf32>
    %cst_27 = arith.constant 0.000000e+00 : f32
    %37 = vector.broadcast %cst_27 : f32 to vector<8x256xf32>
    %38 = arith.maximumf %36, %37 : vector<8x256xf32>
    %c0_28 = arith.constant 0 : index
    %c0_29 = arith.constant 0 : index
    %c0_30 = arith.constant 0 : index
    %39 = vector.load %arg12[%c0_28, %c0_29, %c0_30] : memref<1x8x256xf32, #tpu.memory_space<vmem>>, vector<1x8x256xf32>
    %40 = vector.shape_cast %39 : vector<1x8x256xf32> to vector<8x256xf32>
    %41 = vector.shape_cast %38 : vector<8x256xf32> to vector<1x8x256xf32>
    tpu.vector_store %arg12[%c0_28, %c0_29, %c0_30], %41 {strides = array<i32>} : memref<1x8x256xf32, #tpu.memory_space<vmem>>, vector<1x8x256xf32>,
    %c0_31 = arith.constant 0 : index
    %c0_32 = arith.constant 0 : index
    %c0_33 = arith.constant 0 : index
    %42 = vector.load %arg13[%c0_31, %c0_32, %c0_33] : memref<1x1x256xf32, #tpu.memory_space<vmem>>, vector<1x1x256xf32>
    %43 = vector.shape_cast %42 : vector<1x1x256xf32> to vector<1x256xf32>
    %44 = vector.shape_cast %26 : vector<1x256xf32> to vector<1x1x256xf32>
    tpu.vector_store %arg13[%c0_31, %c0_32, %c0_33], %44 {strides = array<i32>} : memref<1x1x256xf32, #tpu.memory_space<vmem>>, vector<1x1x256xf32>,
    return
  }
  func.func @transform_0(%arg0: i32, %arg1: i32) -> (i32, i32, i32) {
    %c0_i32 = arith.constant 0 : i32
    %c0_i32_0 = arith.constant 0 : i32
    return %arg0, %c0_i32, %arg1 : i32, i32, i32
  }
  func.func @transform_1(%arg0: i32, %arg1: i32) -> (i32, i32, i32) {
    %c0_i32 = arith.constant 0 : i32
    %c0_i32_0 = arith.constant 0 : i32
    return %arg0, %c0_i32, %arg1 : i32, i32, i32
  }
  func.func @transform_2(%arg0: i32, %arg1: i32) -> (i32, i32) {
    %c0_i32 = arith.constant 0 : i32
    %c0_i32_0 = arith.constant 0 : i32
    %c0_i32_1 = arith.constant 0 : i32
    return %c0_i32, %c0_i32_0 : i32, i32
  }
  func.func @transform_3(%arg0: i32, %arg1: i32) -> (i32, i32) {
    %c0_i32 = arith.constant 0 : i32
    %c0_i32_0 = arith.constant 0 : i32
    %c0_i32_1 = arith.constant 0 : i32
    return %c0_i32, %c0_i32_0 : i32, i32
  }
  func.func @transform_4(%arg0: i32, %arg1: i32) -> (i32, i32) {
    %c0_i32 = arith.constant 0 : i32
    %c0_i32_0 = arith.constant 0 : i32
    %c0_i32_1 = arith.constant 0 : i32
    return %c0_i32, %c0_i32_0 : i32, i32
  }
  func.func @transform_5(%arg0: i32, %arg1: i32) -> (i32, i32) {
    %c0_i32 = arith.constant 0 : i32
    %c0_i32_0 = arith.constant 0 : i32
    %c0_i32_1 = arith.constant 0 : i32
    return %c0_i32, %c0_i32_0 : i32, i32
  }
  func.func @transform_6(%arg0: i32, %arg1: i32) -> (i32, i32) {
    %c0_i32 = arith.constant 0 : i32
    %c0_i32_0 = arith.constant 0 : i32
    %c0_i32_1 = arith.constant 0 : i32
    return %c0_i32, %c0_i32_0 : i32, i32
  }
  func.func @transform_7(%arg0: i32, %arg1: i32) -> (i32, i32) {
    %c0_i32 = arith.constant 0 : i32
    %c0_i32_0 = arith.constant 0 : i32
    %c0_i32_1 = arith.constant 0 : i32
    return %c0_i32, %c0_i32_0 : i32, i32
  }
  func.func @transform_8(%arg0: i32, %arg1: i32) -> (i32, i32) {
    %c0_i32 = arith.constant 0 : i32
    %c0_i32_0 = arith.constant 0 : i32
    %c0_i32_1 = arith.constant 0 : i32
    return %c0_i32, %c0_i32_0 : i32, i32
  }
  func.func @transform_9(%arg0: i32, %arg1: i32) -> (i32, i32) {
    %c0_i32 = arith.constant 0 : i32
    %c0_i32_0 = arith.constant 0 : i32
    %c0_i32_1 = arith.constant 0 : i32
    return %c0_i32, %c0_i32_0 : i32, i32
  }
  func.func @transform_10(%arg0: i32, %arg1: i32) -> (i32, i32, i32) {
    %c0_i32 = arith.constant 0 : i32
    %c0_i32_0 = arith.constant 0 : i32
    return %arg0, %c0_i32, %arg1 : i32, i32, i32
  }
  func.func @transform_11(%arg0: i32, %arg1: i32) -> (i32, i32, i32) {
    %c0_i32 = arith.constant 0 : i32
    %c0_i32_0 = arith.constant 0 : i32
    return %arg0, %c0_i32, %arg1 : i32, i32, i32
  }
}

</mosaic_0001>

<llo_original>
// kernel: gated_attention_forward.1
$region0: #{gated_attention_forward.1}
  #allocation0 [shape = 'u32[]', space=smem, size = 0x4, offset = 0x4, fixed_abs, tag = 'smem constant byte address 0x4 - core index']
  #allocation1 [shape = 'u32[144,128]{1,0:T(1,128)}', space=vmem, size = 0x12000, scoped, tag = 'internal scratch']
  #allocation2 [shape = 'f32[1,1]{1,0:T(1,128)S(1)}', space=vmem, size = 0x200, scoped, tag = 'scoped memory for gated_attention_forward.1']
  %s0 = inlined_call_operand.vmem [shape: f32[2,8,256], index: 0, kind: input, shape index: {}]
  %s1 = inlined_call_operand.vmem [shape: f32[2,8,256], index: 1, kind: input, shape index: {}]
  %s2 = inlined_call_operand.vmem [shape: f32[8,8], index: 2, kind: input, shape index: {}]
  %s3 = inlined_call_operand.vmem [shape: f32[8,8], index: 3, kind: input, shape index: {}]
  %s4 = inlined_call_operand.vmem [shape: f32[8,1], index: 4, kind: input, shape index: {}]
  %s5 = inlined_call_operand.vmem [shape: f32[8,1], index: 5, kind: input, shape index: {}]
  %s6 = inlined_call_operand.<no memory space> [shape: f32[1,1], index: 6, kind: input, shape index: {}]
  %s7 = inlined_call_operand.vmem [shape: f32[8,8], index: 7, kind: input, shape index: {}]
  %s8 = inlined_call_operand.vmem [shape: f32[8,8], index: 8, kind: input, shape index: {}]
  %s9 = inlined_call_operand.vmem [shape: f32[8,1], index: 9, kind: input, shape index: {}]
  %s10 = inlined_call_operand.vmem [shape: f32[2,8,256], index: 10, kind: output, shape index: {0}]
  %s11 = inlined_call_operand.vmem [shape: f32[2,1,256], index: 11, kind: output, shape index: {1}]
  %12 = xla_tuple %s10, %s11
  %s13 = sld [smem:[#allocation0]]
  $region81: #{gated_attention_forward.1} parent=0
    _
  %s15 = ssub.s32 1, %s13
  %s16 = scalar_select 0, %s15, %s13
  %v17 = vstv %s6
  %18 = vst [vmem:[#allocation2] sm:$0x1] %v17
  loop: start=0, step=1, limit=4
  $region2: #{gated_attention_forward.1} parent=0 // loop_pre_header
    _
  $region3: #{gated_attention_forward.1} parent=0 // loop_header
    %s20 = sphi 0, %s24
    %p21 = scmp.ge.s32.totalorder %s20, 4
    %s27 = sphi 0, %s39
    %s28 = sphi 0, %s35
    %s29 = sphi 0, %s27
    %s30 = sphi 0, %s28
    %s31 = sphi 0, %s29
    %s32 = sphi 0, %s30
    %s44 = sphi 0, %s46
    %s47 = sphi 0, %s44
    %s48 = sphi 0, %s47
    %s64 = sphi 0, %s48
    %s72 = sphi 0, %s74
    %s75 = sphi 0, %s72
    %s76 = sphi 0, %s75
    %s92 = sphi 0, %s76
    %s96 = sphi 0, %s96
    %s98 = sphi 0, %s96
    %s99 = sphi 0, %s98
    %s113 = sphi 0, %s99
    %s117 = sphi 0, %s117
    %s119 = sphi 0, %s117
    %s120 = sphi 0, %s119
    %s134 = sphi 0, %s120
    %s138 = sphi 0, %s138
    %s140 = sphi 0, %s138
    %s141 = sphi 0, %s140
    %s155 = sphi 0, %s141
    %s159 = sphi 0, %s159
    %s161 = sphi 0, %s159
    %s162 = sphi 0, %s161
    %s176 = sphi 0, %s162
    %s180 = sphi 0, %s180
    %s182 = sphi 0, %s180
    %s183 = sphi 0, %s182
    %s197 = sphi 0, %s183
    %s201 = sphi 0, %s201
    %s203 = sphi 0, %s201
    %s204 = sphi 0, %s203
    %s218 = sphi 0, %s204
    %s222 = sphi 0, %s222
    %s224 = sphi 0, %s222
    %s225 = sphi 0, %s224
    %s239 = sphi 0, %s225
    %s243 = sphi 0, %s243
    %s245 = sphi 0, %s243
    %s246 = sphi 0, %s245
    %s260 = sphi 0, %s246
    %s268 = sphi 0, %s270
    %s271 = sphi 0, %s268
    %s272 = sphi 0, %s271
    %s288 = sphi 0, %s272
    %s296 = sphi 0, %s298
    %s299 = sphi 0, %s296
    %s300 = sphi 0, %s299
    %s316 = sphi 0, %s300
  $region4: #{gated_attention_forward.1} parent=0 // loop_header_branch
    %23 = sbr.rel (%p21) target = $region8
  $region5: #{gated_attention_forward.1} parent=0 // loop_body
    %s25 = ssub.s32 %s20, 1
    %s26 = ssub.s32 %s20, 2
    %s33 = sadd.s32 1, %s28
    %p34 = scmp.ge.s32.totalorder %s33, 1
    %s35 = scalar_select %p34, 0, %s33
    %s36 = sadd.s32 1, %s27
    %s37 = scalar_select %p34, %s36, %s27
    %p38 = scmp.ge.s32.totalorder %s37, 2
    %s39 = scalar_select %p38, 0, %s37
    %s40 = ssub.s32 %s27, %s39
    %s41 = ssub.s32 %s28, %s35
    %s42 = sor.u32 %s40, %s41
    %p43 = scmp.eq.s32.totalorder %s42, 0
    %s45 = sadd.s32 %s44, 1
    %s46 = scalar_select %p43, %s44, %s45
    %p49 = pneg %p43
    %p50 = scmp.eq.s32.totalorder %s20, 1
    %p51 = por %p49, %p50
    %p52 = scmp.ne.s32.totalorder %s44, %s47
    %p53 = scmp.eq.s32.totalorder %s20, 0
    %p54 = por %p52, %p53
    %p55 = scmp.ne.s32.totalorder %s44, %s47
    %p56 = scmp.eq.s32.totalorder %s25, 1
    %p57 = por %p55, %p56
    %p58 = scmp.ne.s32.totalorder %s47, %s48
    %p59 = scmp.eq.s32.totalorder %s25, 0
    %p60 = por %p58, %p59
    %p61 = scmp.ne.s32.totalorder %s47, %s48
    %p62 = scmp.eq.s32.totalorder %s26, 1
    %p63 = por %p61, %p62
    %p65 = scmp.ne.s32.totalorder %s48, %s64
    %p66 = scmp.eq.s32.totalorder %s26, 0
    %p67 = por %p65, %p66
    %s68 = ssub.s32 %s27, %s39
    %s69 = ssub.s32 %s28, %s35
    %s70 = sor.u32 %s68, %s69
    %p71 = scmp.eq.s32.totalorder %s70, 0
    %s73 = sadd.s32 %s72, 1
    %s74 = scalar_select %p71, %s72, %s73
    %p77 = pneg %p71
    %p78 = scmp.eq.s32.totalorder %s20, 1
    %p79 = por %p77, %p78
    %p80 = scmp.ne.s32.totalorder %s72, %s75
    %p81 = scmp.eq.s32.totalorder %s20, 0
    %p82 = por %p80, %p81
    %p83 = scmp.ne.s32.totalorder %s72, %s75
    %p84 = scmp.eq.s32.totalorder %s25, 1
    %p85 = por %p83, %p84
    %p86 = scmp.ne.s32.totalorder %s75, %s76
    %p87 = scmp.eq.s32.totalorder %s25, 0
    %p88 = por %p86, %p87
    %p89 = scmp.ne.s32.totalorder %s75, %s76
    %p90 = scmp.eq.s32.totalorder %s26, 1
    %p91 = por %p89, %p90
    %p93 = scmp.ne.s32.totalorder %s76, %s92
    %p94 = scmp.eq.s32.totalorder %s26, 0
    %p95 = por %p93, %p94
    %s97 = sadd.s32 %s96, 1
    %p100 = scmp.eq.s32.totalorder %s20, 1
    %p101 = scmp.ne.s32.totalorder %s96, %s98
    %p102 = scmp.eq.s32.totalorder %s20, 0
    %p103 = por %p101, %p102
    %p104 = scmp.ne.s32.totalorder %s96, %s98
    %p105 = scmp.eq.s32.totalorder %s25, 1
    %p106 = por %p104, %p105
    %p107 = scmp.ne.s32.totalorder %s98, %s99
    %p108 = scmp.eq.s32.totalorder %s25, 0
    %p109 = por %p107, %p108
    %p110 = scmp.ne.s32.totalorder %s98, %s99
    %p111 = scmp.eq.s32.totalorder %s26, 1
    %p112 = por %p110, %p111
    %p114 = scmp.ne.s32.totalorder %s99, %s113
    %p115 = scmp.eq.s32.totalorder %s26, 0
    %p116 = por %p114, %p115
    %s118 = sadd.s32 %s117, 1
    %p121 = scmp.eq.s32.totalorder %s20, 1
    %p122 = scmp.ne.s32.totalorder %s117, %s119
    %p123 = scmp.eq.s32.totalorder %s20, 0
    %p124 = por %p122, %p123
    %p125 = scmp.ne.s32.totalorder %s117, %s119
    %p126 = scmp.eq.s32.totalorder %s25, 1
    %p127 = por %p125, %p126
    %p128 = scmp.ne.s32.totalorder %s119, %s120
    %p129 = scmp.eq.s32.totalorder %s25, 0
    %p130 = por %p128, %p129
    %p131 = scmp.ne.s32.totalorder %s119, %s120
    %p132 = scmp.eq.s32.totalorder %s26, 1
    %p133 = por %p131, %p132
    %p135 = scmp.ne.s32.totalorder %s120, %s134
    %p136 = scmp.eq.s32.totalorder %s26, 0
    %p137 = por %p135, %p136
    %s139 = sadd.s32 %s138, 1
    %p142 = scmp.eq.s32.totalorder %s20, 1
    %p143 = scmp.ne.s32.totalorder %s138, %s140
    %p144 = scmp.eq.s32.totalorder %s20, 0
    %p145 = por %p143, %p144
    %p146 = scmp.ne.s32.totalorder %s138, %s140
    %p147 = scmp.eq.s32.totalorder %s25, 1
    %p148 = por %p146, %p147
    %p149 = scmp.ne.s32.totalorder %s140, %s141
    %p150 = scmp.eq.s32.totalorder %s25, 0
    %p151 = por %p149, %p150
    %p152 = scmp.ne.s32.totalorder %s140, %s141
    %p153 = scmp.eq.s32.totalorder %s26, 1
    %p154 = por %p152, %p153
    %p156 = scmp.ne.s32.totalorder %s141, %s155
    %p157 = scmp.eq.s32.totalorder %s26, 0
    %p158 = por %p156, %p157
    %s160 = sadd.s32 %s159, 1
    %p163 = scmp.eq.s32.totalorder %s20, 1
    %p164 = scmp.ne.s32.totalorder %s159, %s161
    %p165 = scmp.eq.s32.totalorder %s20, 0
    %p166 = por %p164, %p165
    %p167 = scmp.ne.s32.totalorder %s159, %s161
    %p168 = scmp.eq.s32.totalorder %s25, 1
    %p169 = por %p167, %p168
    %p170 = scmp.ne.s32.totalorder %s161, %s162
    %p171 = scmp.eq.s32.totalorder %s25, 0
    %p172 = por %p170, %p171
    %p173 = scmp.ne.s32.totalorder %s161, %s162
    %p174 = scmp.eq.s32.totalorder %s26, 1
    %p175 = por %p173, %p174
    %p177 = scmp.ne.s32.totalorder %s162, %s176
    %p178 = scmp.eq.s32.totalorder %s26, 0
    %p179 = por %p177, %p178
    %s181 = sadd.s32 %s180, 1
    %p184 = scmp.eq.s32.totalorder %s20, 1
    %p185 = scmp.ne.s32.totalorder %s180, %s182
    %p186 = scmp.eq.s32.totalorder %s20, 0
    %p187 = por %p185, %p186
    %p188 = scmp.ne.s32.totalorder %s180, %s182
    %p189 = scmp.eq.s32.totalorder %s25, 1
    %p190 = por %p188, %p189
    %p191 = scmp.ne.s32.totalorder %s182, %s183
    %p192 = scmp.eq.s32.totalorder %s25, 0
    %p193 = por %p191, %p192
    %p194 = scmp.ne.s32.totalorder %s182, %s183
    %p195 = scmp.eq.s32.totalorder %s26, 1
    %p196 = por %p194, %p195
    %p198 = scmp.ne.s32.totalorder %s183, %s197
    %p199 = scmp.eq.s32.totalorder %s26, 0
    %p200 = por %p198, %p199
    %s202 = sadd.s32 %s201, 1
    %p205 = scmp.eq.s32.totalorder %s20, 1
    %p206 = scmp.ne.s32.totalorder %s201, %s203
    %p207 = scmp.eq.s32.totalorder %s20, 0
    %p208 = por %p206, %p207
    %p209 = scmp.ne.s32.totalorder %s201, %s203
    %p210 = scmp.eq.s32.totalorder %s25, 1
    %p211 = por %p209, %p210
    %p212 = scmp.ne.s32.totalorder %s203, %s204
    %p213 = scmp.eq.s32.totalorder %s25, 0
    %p214 = por %p212, %p213
    %p215 = scmp.ne.s32.totalorder %s203, %s204
    %p216 = scmp.eq.s32.totalorder %s26, 1
    %p217 = por %p215, %p216
    %p219 = scmp.ne.s32.totalorder %s204, %s218
    %p220 = scmp.eq.s32.totalorder %s26, 0
    %p221 = por %p219, %p220
    %s223 = sadd.s32 %s222, 1
    %p226 = scmp.eq.s32.totalorder %s20, 1
    %p227 = scmp.ne.s32.totalorder %s222, %s224
    %p228 = scmp.eq.s32.totalorder %s20, 0
    %p229 = por %p227, %p228
    %p230 = scmp.ne.s32.totalorder %s222, %s224
    %p231 = scmp.eq.s32.totalorder %s25, 1
    %p232 = por %p230, %p231
    %p233 = scmp.ne.s32.totalorder %s224, %s225
    %p234 = scmp.eq.s32.totalorder %s25, 0
    %p235 = por %p233, %p234
    %p236 = scmp.ne.s32.totalorder %s224, %s225
    %p237 = scmp.eq.s32.totalorder %s26, 1
    %p238 = por %p236, %p237
    %p240 = scmp.ne.s32.totalorder %s225, %s239
    %p241 = scmp.eq.s32.totalorder %s26, 0
    %p242 = por %p240, %p241
    %s244 = sadd.s32 %s243, 1
    %p247 = scmp.eq.s32.totalorder %s20, 1
    %p248 = scmp.ne.s32.totalorder %s243, %s245
    %p249 = scmp.eq.s32.totalorder %s20, 0
    %p250 = por %p248, %p249
    %p251 = scmp.ne.s32.totalorder %s243, %s245
    %p252 = scmp.eq.s32.totalorder %s25, 1
    %p253 = por %p251, %p252
    %p254 = scmp.ne.s32.totalorder %s245, %s246
    %p255 = scmp.eq.s32.totalorder %s25, 0
    %p256 = por %p254, %p255
    %p257 = scmp.ne.s32.totalorder %s245, %s246
    %p258 = scmp.eq.s32.totalorder %s26, 1
    %p259 = por %p257, %p258
    %p261 = scmp.ne.s32.totalorder %s246, %s260
    %p262 = scmp.eq.s32.totalorder %s26, 0
    %p263 = por %p261, %p262
    %s264 = ssub.s32 %s27, %s39
    %s265 = ssub.s32 %s28, %s35
    %s266 = sor.u32 %s264, %s265
    %p267 = scmp.eq.s32.totalorder %s266, 0
    %s269 = sadd.s32 %s268, 1
    %s270 = scalar_select %p267, %s268, %s269
    %p273 = pneg %p267
    %p274 = scmp.eq.s32.totalorder %s20, 1
    %p275 = por %p273, %p274
    %p276 = scmp.ne.s32.totalorder %s268, %s271
    %p277 = scmp.eq.s32.totalorder %s20, 0
    %p278 = por %p276, %p277
    %p279 = scmp.ne.s32.totalorder %s268, %s271
    %p280 = scmp.eq.s32.totalorder %s25, 1
    %p281 = por %p279, %p280
    %p282 = scmp.ne.s32.totalorder %s271, %s272
    %p283 = scmp.eq.s32.totalorder %s25, 0
    %p284 = por %p282, %p283
    %p285 = scmp.ne.s32.totalorder %s271, %s272
    %p286 = scmp.eq.s32.totalorder %s26, 1
    %p287 = por %p285, %p286
    %p289 = scmp.ne.s32.totalorder %s272, %s288
    %p290 = scmp.eq.s32.totalorder %s26, 0
    %p291 = por %p289, %p290
    %s292 = ssub.s32 %s27, %s39
    %s293 = ssub.s32 %s28, %s35
    %s294 = sor.u32 %s292, %s293
    %p295 = scmp.eq.s32.totalorder %s294, 0
    %s297 = sadd.s32 %s296, 1
    %s298 = scalar_select %p295, %s296, %s297
    %p301 = pneg %p295
    %p302 = scmp.eq.s32.totalorder %s20, 1
    %p303 = por %p301, %p302
    %p304 = scmp.ne.s32.totalorder %s296, %s299
    %p305 = scmp.eq.s32.totalorder %s20, 0
    %p306 = por %p304, %p305
    %p307 = scmp.ne.s32.totalorder %s296, %s299
    %p308 = scmp.eq.s32.totalorder %s25, 1
    %p309 = por %p307, %p308
    %p310 = scmp.ne.s32.totalorder %s299, %s300
    %p311 = scmp.eq.s32.totalorder %s25, 0
    %p312 = por %p310, %p311
    %p313 = scmp.ne.s32.totalorder %s299, %s300
    %p314 = scmp.eq.s32.totalorder %s26, 1
    %p315 = por %p313, %p314
    %p317 = scmp.ne.s32.totalorder %s300, %s316
    %p318 = scmp.eq.s32.totalorder %s26, 0
    %p319 = por %p317, %p318
    %p320 = scmp.le.s32.totalorder 1, %s20
    %p321 = scmp.lt.s32.totalorder %s20, 3
    %p322 = pnand %p320, %p321
    %p323 = pneg %p322
    // Predicated region
    $region9: #{gated_attention_forward.1} parent=5 // pred_check
      _
    $region10: #{gated_attention_forward.1} parent=5 // pred_check_branch
      %325 = sbr.rel (%p322) target = $region12
    $region11: #{gated_attention_forward.1} parent=5 // pred_region
      %s326 = ssub.s32 %s20, 1
      // Predicated region
      $region13: #{gated_attention_forward.1} parent=11 // pred_check
        %p327 = pneg %p109
      $region14: #{gated_attention_forward.1} parent=11 // pred_check_branch
        %329 = sbr.rel (%p327) target = $region16
      $region15: #{gated_attention_forward.1} parent=11 // pred_region
        _
      $region16: #{gated_attention_forward.1} parent=11 // pred_fallthru
        _
      // Predicated region
      $region17: #{gated_attention_forward.1} parent=11 // pred_check
        %p330 = pneg %p130
      $region18: #{gated_attention_forward.1} parent=11 // pred_check_branch
        %332 = sbr.rel (%p330) target = $region20
      $region19: #{gated_attention_forward.1} parent=11 // pred_region
        _
      $region20: #{gated_attention_forward.1} parent=11 // pred_fallthru
        _
      // Predicated region
      $region21: #{gated_attention_forward.1} parent=11 // pred_check
        %p333 = pneg %p151
      $region22: #{gated_attention_forward.1} parent=11 // pred_check_branch
        %335 = sbr.rel (%p333) target = $region24
      $region23: #{gated_attention_forward.1} parent=11 // pred_region
        _
      $region24: #{gated_attention_forward.1} parent=11 // pred_fallthru
        _
      // Predicated region
      $region25: #{gated_attention_forward.1} parent=11 // pred_check
        %p336 = pneg %p172
      $region26: #{gated_attention_forward.1} parent=11 // pred_check_branch
        %338 = sbr.rel (%p336) target = $region28
      $region27: #{gated_attention_forward.1} parent=11 // pred_region
        _
      $region28: #{gated_attention_forward.1} parent=11 // pred_fallthru
        _
      // Predicated region
      $region29: #{gated_attention_forward.1} parent=11 // pred_check
        %p339 = pneg %p193
      $region30: #{gated_attention_forward.1} parent=11 // pred_check_branch
        %341 = sbr.rel (%p339) target = $region32
      $region31: #{gated_attention_forward.1} parent=11 // pred_region
        _
      $region32: #{gated_attention_forward.1} parent=11 // pred_fallthru
        _
      // Predicated region
      $region33: #{gated_attention_forward.1} parent=11 // pred_check
        %p342 = pneg %p214
      $region34: #{gated_attention_forward.1} parent=11 // pred_check_branch
        %344 = sbr.rel (%p342) target = $region36
      $region35: #{gated_attention_forward.1} parent=11 // pred_region
        _
      $region36: #{gated_attention_forward.1} parent=11 // pred_fallthru
        _
      // Predicated region
      $region37: #{gated_attention_forward.1} parent=11 // pred_check
        %p345 = pneg %p235
      $region38: #{gated_attention_forward.1} parent=11 // pred_check_branch
        %347 = sbr.rel (%p345) target = $region40
      $region39: #{gated_attention_forward.1} parent=11 // pred_region
        _
      $region40: #{gated_attention_forward.1} parent=11 // pred_fallthru
        _
      // Predicated region
      $region41: #{gated_attention_forward.1} parent=11 // pred_check
        %p348 = pneg %p256
      $region42: #{gated_attention_forward.1} parent=11 // pred_check_branch
        %350 = sbr.rel (%p348) target = $region44
      $region43: #{gated_attention_forward.1} parent=11 // pred_region
        _
      $region44: #{gated_attention_forward.1} parent=11 // pred_fallthru
        _
    $region12: #{gated_attention_forward.1} parent=5 // pred_fallthru
      _
    %p351 = scmp.lt.s32.totalorder %s20, 2
    // Predicated region
    $region45: #{gated_attention_forward.1} parent=5 // pred_check
      %p352 = pneg %p351
    $region46: #{gated_attention_forward.1} parent=5 // pred_check_branch
      %354 = sbr.rel (%p352) target = $region48
    $region47: #{gated_attention_forward.1} parent=5 // pred_region
      // Predicated region
      $region49: #{gated_attention_forward.1} parent=47 // pred_check
        %p355 = pneg %p54
      $region50: #{gated_attention_forward.1} parent=47 // pred_check_branch
        %357 = sbr.rel (%p355) target = $region52
      $region51: #{gated_attention_forward.1} parent=47 // pred_region
        %s358 = smul.u32 2, %s28
        %p359 = scmp.lt.s32.totalorder %s27, 1
        %s360 = scalar_select %p359, %s27, 1
        %p361 = scmp.lt.s32.totalorder %s358, 1
        %s362 = scalar_select %p361, %s358, 1
        %s363 = smul.addr %s360, 2
        %s364 = sadd.s32 %s362, %s363
        %s365 = smul.addr %s364, 8
        %s366 = scalar_lea.vmem %s0, %s365
        %s367 = smul.u32 2, %s28
      $region52: #{gated_attention_forward.1} parent=47 // pred_fallthru
        _
      // Predicated region
      $region53: #{gated_attention_forward.1} parent=47 // pred_check
        %p368 = pneg %p82
      $region54: #{gated_attention_forward.1} parent=47 // pred_check_branch
        %370 = sbr.rel (%p368) target = $region56
      $region55: #{gated_attention_forward.1} parent=47 // pred_region
        %s371 = smul.u32 2, %s28
        %p372 = scmp.lt.s32.totalorder %s27, 1
        %s373 = scalar_select %p372, %s27, 1
        %p374 = scmp.lt.s32.totalorder %s371, 1
        %s375 = scalar_select %p374, %s371, 1
        %s376 = smul.addr %s373, 2
        %s377 = sadd.s32 %s375, %s376
        %s378 = smul.addr %s377, 8
        %s379 = scalar_lea.vmem %s1, %s378
        %s380 = smul.u32 2, %s28
      $region56: #{gated_attention_forward.1} parent=47 // pred_fallthru
        _
    $region48: #{gated_attention_forward.1} parent=5 // pred_fallthru
      _
    %p381 = scmp.le.s32.totalorder 1, %s20
    %p382 = scmp.lt.s32.totalorder %s20, 3
    %p383 = pnand %p381, %p382
    %p384 = pneg %p383
    // Predicated region
    $region57: #{gated_attention_forward.1} parent=5 // pred_check
      _
    $region58: #{gated_attention_forward.1} parent=5 // pred_check_branch
      %386 = sbr.rel (%p383) target = $region60
    $region59: #{gated_attention_forward.1} parent=5 // pred_region
      %s387 = ssub.s32 %s20, 1
      %s388 = smul.u32 2, %s30
      %p389 = scmp.lt.s32.totalorder %s29, 1
      %s390 = scalar_select %p389, %s29, 1
      %p391 = scmp.lt.s32.totalorder %s388, 1
      %s392 = scalar_select %p391, %s388, 1
      %s393 = smul.addr %s390, 2
      %s394 = sadd.s32 %s392, %s393
      %s395 = smul.addr %s394, 8
      %s396 = scalar_lea.vmem %s0, %s395
      %p397 = pneg %p60
      %p398 = pneg %p57
      %s399 = smul.u32 2, %s30
      %p400 = scmp.lt.s32.totalorder %s29, 1
      %s401 = scalar_select %p400, %s29, 1
      %p402 = scmp.lt.s32.totalorder %s399, 1
      %s403 = scalar_select %p402, %s399, 1
      %s404 = smul.addr %s401, 2
      %s405 = sadd.s32 %s403, %s404
      %s406 = smul.addr %s405, 8
      %s407 = scalar_lea.vmem %s1, %s406
      %p408 = pneg %p88
      %p409 = pneg %p85
      %p410 = pneg %p109
      %p411 = pneg %p106
      %p412 = pneg %p130
      %p413 = pneg %p127
      %p414 = pneg %p151
      %p415 = pneg %p148
      %p416 = pneg %p172
      %p417 = pneg %p169
      %p418 = pneg %p193
      %p419 = pneg %p190
      %p420 = pneg %p214
      %p421 = pneg %p211
      %p422 = pneg %p235
      %p423 = pneg %p232
      %p424 = pneg %p256
      %p425 = pneg %p253
      %p426 = pneg %p284
      %p427 = pneg %p281
      %s428 = smul.u32 2, %s30
      %p429 = scmp.lt.s32.totalorder %s29, 1
      %s430 = scalar_select %p429, %s29, 1
      %p431 = scmp.lt.s32.totalorder %s428, 1
      %s432 = scalar_select %p431, %s428, 1
      %s433 = smul.addr %s430, 2
      %s434 = sadd.s32 %s432, %s433
      %s435 = smul.addr %s434, 8
      %s436 = scalar_lea.vmem %s10, %s435
      %p437 = pneg %p312
      %p438 = pneg %p309
      %s439 = smul.u32 2, %s30
      %p440 = scmp.lt.s32.totalorder %s29, 1
      %s441 = scalar_select %p440, %s29, 1
      %p442 = scmp.lt.s32.totalorder %s439, 1
      %s443 = scalar_select %p442, %s439, 1
      %s444 = smul.addr %s441, 2
      %s445 = sadd.s32 %s443, %s444
      %s446 = scalar_lea.vmem %s11, %s445
      %s447 = smul.u32 2, %s30
      %p448 = scmp.lt.s32.totalorder %s29, 1
      %s449 = scalar_select %p448, %s29, 1
      %p450 = scmp.lt.s32.totalorder %s447, 1
      %s451 = scalar_select %p450, %s447, 1
      %s452 = smul.addr %s449, 2
      %s453 = sadd.s32 %s451, %s452
      %s454 = smul.addr %s453, 8
      %s455 = scalar_lea.vmem %s0, %s454
      %s456 = smul.u32 2, %s30
      %s457 = smul.u32 2, %s30
      %p458 = scmp.lt.s32.totalorder %s29, 1
      %s459 = scalar_select %p458, %s29, 1
      %p460 = scmp.lt.s32.totalorder %s457, 1
      %s461 = scalar_select %p460, %s457, 1
      %s462 = smul.addr %s459, 2
      %s463 = sadd.s32 %s461, %s462
      %s464 = smul.addr %s463, 8
      %s465 = scalar_lea.vmem %s1, %s464
      %s466 = smul.u32 2, %s30
      %s467 = smul.u32 2, %s30
      %p468 = scmp.lt.s32.totalorder %s29, 1
      %s469 = scalar_select %p468, %s29, 1
      %p470 = scmp.lt.s32.totalorder %s467, 1
      %s471 = scalar_select %p470, %s467, 1
      %s472 = smul.addr %s469, 2
      %s473 = sadd.s32 %s471, %s472
      %s474 = smul.addr %s473, 8
      %s475 = scalar_lea.vmem %s10, %s474
      %s476 = smul.u32 2, %s30
      %s477 = smul.u32 2, %s30
      %p478 = scmp.lt.s32.totalorder %s29, 1
      %s479 = scalar_select %p478, %s29, 1
      %p480 = scmp.lt.s32.totalorder %s477, 1
      %s481 = scalar_select %p480, %s477, 1
      %s482 = smul.addr %s479, 2
      %s483 = sadd.s32 %s481, %s482
      %s484 = scalar_lea.vmem %s11, %s483
      %s485 = smul.u32 2, %s30
      %v486 = vld [vmem:[%s455] sm:$0xff]
      %v487 = vld [vmem:[%s455 + $0x8] sm:$0xff]
      %v488 = vld [vmem:[%s465] sm:$0xff]
      %v489 = vld [vmem:[%s465 + $0x8] sm:$0xff]
      %v490 = vld [vmem:[%s2] sm:$0xff]
      %v491 = vld [vmem:[%s3] sm:$0xff]
      %vm492 = vcmask 64512
      %v494 = vsel %vm492, %v491, 0
      %496 = vmatprep.subr.mxu0 %v489
      %497 = vmatpush1.msra.mxu0 %v488
      %498 = vmatprep.subr.mxu0 0.0
      %499 = vmatpush1.msra.mxu0 0.0
      %500 = vmatprep.subr.mxu0 0.0
      %501 = vmatpush1.msra.mxu0 0.0
      %502 = vmatprep.subr.mxu0 0.0
      %503 = vmatpush1.msra.mxu0 0.0
      %504 = vmatprep.subr.mxu0 0.0
      %505 = vmatpush1.msra.mxu0 0.0
      %506 = vmatprep.subr.mxu0 0.0
      %507 = vmatpush1.msra.mxu0 0.0
      %508 = vmatprep.subr.mxu0 0.0
      %509 = vmatpush1.msra.mxu0 0.0
      %510 = vmatprep.subr.mxu0 0.0
      %511 = vmatpush1.msra.mxu0 0.0
      %512 = vmatprep.subr.mxu0 0.0
      %513 = vmatpush1.msra.mxu0 0.0
      %514 = vmatprep.subr.mxu0 0.0
      %515 = vmatpush1.msra.mxu0 0.0
      %516 = vmatprep.subr.mxu0 0.0
      %517 = vmatpush1.msra.mxu0 0.0
      %518 = vmatprep.subr.mxu0 0.0
      %519 = vmatpush1.msra.mxu0 0.0
      %520 = vmatprep.subr.mxu0 0.0
      %521 = vmatpush1.msra.mxu0 0.0
      %522 = vmatprep.subr.mxu0 0.0
      %523 = vmatpush1.msra.mxu0 0.0
      %524 = vmatprep.subr.mxu0 0.0
      %525 = vmatpush1.msra.mxu0 0.0
      %526 = vmatprep.subr.mxu0 0.0
      %527 = vmatpush1.msra.mxu0 0.0
      %528 = vmatprep.subr.mxu0 0.0
      %529 = vmatpush1.msra.mxu0 0.0
      %530 = vmatprep.subr.mxu0 0.0
      %531 = vmatpush1.msra.mxu0 0.0
      %532 = vmatprep.subr.mxu0 0.0
      %533 = vmatpush1.msra.mxu0 0.0
      %534 = vmatprep.subr.mxu0 0.0
      %535 = vmatpush1.msra.mxu0 0.0
      %536 = vmatprep.subr.mxu0 0.0
      %537 = vmatpush1.msra.mxu0 0.0
      %538 = vmatprep.subr.mxu0 0.0
      %539 = vmatpush1.msra.mxu0 0.0
      %540 = vmatprep.subr.mxu0 0.0
      %541 = vmatpush1.msra.mxu0 0.0
      %542 = vmatprep.subr.mxu0 0.0
      %543 = vmatpush1.msra.mxu0 0.0
      %544 = vmatprep.subr.mxu0 0.0
      %545 = vmatpush1.msra.mxu0 0.0
      %546 = vmatprep.subr.mxu0 0.0
      %547 = vmatpush1.msra.mxu0 0.0
      %548 = vmatprep.subr.mxu0 0.0
      %549 = vmatpush1.msra.mxu0 0.0
      %550 = vmatprep.subr.mxu0 0.0
      %551 = vmatpush1.msra.mxu0 0.0
      %552 = vmatprep.subr.mxu0 0.0
      %553 = vmatpush1.msra.mxu0 0.0
      %554 = vmatprep.subr.mxu0 0.0
      %555 = vmatpush1.msra.mxu0 0.0
      %556 = vmatprep.subr.mxu0 0.0
      %557 = vmatpush1.msra.mxu0 0.0
      %558 = vmatprep.subr.mxu0 0.0
      %559 = vmatpush1.msra.mxu0 0.0
      %560 = vmatprep.mubr.f32.mxu0 0.0
      %561 = vmatmul.mubr.f32.gmra.mrb[0].mxu0 %v494
      %v562 = vpop.f32.mrb[0].mxu0
      %v563 = vadd.f32 0.0, %v562
      %v564 = vpop.f32.mrb[0].mxu0
      %v565 = vadd.f32 0.0, %v564
      %566 = vdwg.mxu0
      %v568 = vsel %vm492, %v490, 0
      %570 = vmatprep.subr.mxu0 %v487
      %571 = vmatpush1.msra.mxu0 %v486
      %572 = vmatprep.subr.mxu0 0.0
      %573 = vmatpush1.msra.mxu0 0.0
      %574 = vmatprep.subr.mxu0 0.0
      %575 = vmatpush1.msra.mxu0 0.0
      %576 = vmatprep.subr.mxu0 0.0
      %577 = vmatpush1.msra.mxu0 0.0
      %578 = vmatprep.subr.mxu0 0.0
      %579 = vmatpush1.msra.mxu0 0.0
      %580 = vmatprep.subr.mxu0 0.0
      %581 = vmatpush1.msra.mxu0 0.0
      %582 = vmatprep.subr.mxu0 0.0
      %583 = vmatpush1.msra.mxu0 0.0
      %584 = vmatprep.subr.mxu0 0.0
      %585 = vmatpush1.msra.mxu0 0.0
      %586 = vmatprep.subr.mxu0 0.0
      %587 = vmatpush1.msra.mxu0 0.0
      %588 = vmatprep.subr.mxu0 0.0
      %589 = vmatpush1.msra.mxu0 0.0
      %590 = vmatprep.subr.mxu0 0.0
      %591 = vmatpush1.msra.mxu0 0.0
      %592 = vmatprep.subr.mxu0 0.0
      %593 = vmatpush1.msra.mxu0 0.0
      %594 = vmatprep.subr.mxu0 0.0
      %595 = vmatpush1.msra.mxu0 0.0
      %596 = vmatprep.subr.mxu0 0.0
      %597 = vmatpush1.msra.mxu0 0.0
      %598 = vmatprep.subr.mxu0 0.0
      %599 = vmatpush1.msra.mxu0 0.0
      %600 = vmatprep.subr.mxu0 0.0
      %601 = vmatpush1.msra.mxu0 0.0
      %602 = vmatprep.subr.mxu0 0.0
      %603 = vmatpush1.msra.mxu0 0.0
      %604 = vmatprep.subr.mxu0 0.0
      %605 = vmatpush1.msra.mxu0 0.0
      %606 = vmatprep.subr.mxu0 0.0
      %607 = vmatpush1.msra.mxu0 0.0
      %608 = vmatprep.subr.mxu0 0.0
      %609 = vmatpush1.msra.mxu0 0.0
      %610 = vmatprep.subr.mxu0 0.0
      %611 = vmatpush1.msra.mxu0 0.0
      %612 = vmatprep.subr.mxu0 0.0
      %613 = vmatpush1.msra.mxu0 0.0
      %614 = vmatprep.subr.mxu0 0.0
      %615 = vmatpush1.msra.mxu0 0.0
      %616 = vmatprep.subr.mxu0 0.0
      %617 = vmatpush1.msra.mxu0 0.0
      %618 = vmatprep.subr.mxu0 0.0
      %619 = vmatpush1.msra.mxu0 0.0
      %620 = vmatprep.subr.mxu0 0.0
      %621 = vmatpush1.msra.mxu0 0.0
      %622 = vmatprep.subr.mxu0 0.0
      %623 = vmatpush1.msra.mxu0 0.0
      %624 = vmatprep.subr.mxu0 0.0
      %625 = vmatpush1.msra.mxu0 0.0
      %626 = vmatprep.subr.mxu0 0.0
      %627 = vmatpush1.msra.mxu0 0.0
      %628 = vmatprep.subr.mxu0 0.0
      %629 = vmatpush1.msra.mxu0 0.0
      %630 = vmatprep.subr.mxu0 0.0
      %631 = vmatpush1.msra.mxu0 0.0
      %632 = vmatprep.subr.mxu0 0.0
      %633 = vmatpush1.msra.mxu0 0.0
      %634 = vmatprep.mubr.f32.mxu0 0.0
      %635 = vmatmul.mubr.f32.gmra.mrb[0].mxu0 %v568
      %v636 = vpop.f32.mrb[0].mxu0
      %v637 = vadd.f32 %v563, %v636
      %v638 = vpop.f32.mrb[0].mxu0
      %v639 = vadd.f32 %v565, %v638
      %640 = vdwg.mxu0
      %v641 = vld [vmem:[%s4] sm:$0xff]
      %643 = vset.pattern.permute.xlu0 0
      %644 = vperm.xlu0 %643, %v641
      %v645 = vpop.permute.xlu0 %644
      %v647 = vadd.f32 %v637, %v645
      %v648 = vadd.f32 %v639, %v645
      %v649 = vmax.f32 %v647, 0.0
      %v650 = vmax.f32 %v648, 0.0
      %v651 = vld [vmem:[%s5] sm:$0xff]
      %653 = vset.pattern.permute.xlu0 0
      %654 = vperm.xlu0 %653, %v651
      %v655 = vpop.permute.xlu0 %654
      %v657 = vmul.f32 %v655, %v649
      %v658 = vmul.f32 %v655, %v650
      %v659 = vrot.slane %v657, 4
      %v660 = vadd.f32 %v657, %v659
      %v661 = vrot.slane %v660, 2
      %v662 = vadd.f32 %v660, %v661
      %v663 = vrot.slane %v662, 1
      %v664 = vadd.f32 %v662, %v663
      %v665 = vrot.slane %v658, 4
      %v666 = vadd.f32 %v658, %v665
      %v667 = vrot.slane %v666, 2
      %v668 = vadd.f32 %v666, %v667
      %v669 = vrot.slane %v668, 1
      %v670 = vadd.f32 %v668, %v669
      %v671 = vld [vmem:[#allocation2] sm:$0x1]
      %673 = vset.pattern.permute.xlu0 0
      %674 = vperm.xlu0 %673, %v671
      %v675 = vpop.permute.xlu0 %674
      %v677 = vlaneseq
      %v678 = vshrl.u32 %v677, 7
      %v679 = vsub.s32 0, %v678
      %v680 = vrot.slane %v675, %v679
      %v681 = vadd.f32 %v664, %v680
      %v682 = vadd.f32 %v670, %v680
      %v683 = vxor.u32 %v681, 2147483648
      %v684 = vxor.u32 %v682, 2147483648
      %v685 = vmul.f32 %v683, 1.442695
      %v686 = vpow.pop %v685
      %v687 = vmul.f32 %v684, 1.442695
      %v688 = vpow.pop %v687
      %v689 = vadd.f32 %v686, 1.0
      %v690 = vadd.f32 %v688, 1.0
      %v691 = vrcp.pop %v689
      %v692 = vmul.f32 1.0, %v691
      %v693 = vrcp.pop %v690
      %v694 = vmul.f32 1.0, %v693
      %v695 = vld [vmem:[%s7] sm:$0xff]
      %v696 = vmul.f32 %v488, %v692
      %v697 = vmul.f32 %v489, %v694
      %v698 = vld [vmem:[%s8] sm:$0xff]
      %v700 = vsel %vm492, %v698, 0
      %702 = vmatprep.subr.mxu0 %v697
      %703 = vmatpush1.msra.mxu0 %v696
      %704 = vmatprep.subr.mxu0 0.0
      %705 = vmatpush1.msra.mxu0 0.0
      %706 = vmatprep.subr.mxu0 0.0
      %707 = vmatpush1.msra.mxu0 0.0
      %708 = vmatprep.subr.mxu0 0.0
      %709 = vmatpush1.msra.mxu0 0.0
      %710 = vmatprep.subr.mxu0 0.0
      %711 = vmatpush1.msra.mxu0 0.0
      %712 = vmatprep.subr.mxu0 0.0
      %713 = vmatpush1.msra.mxu0 0.0
      %714 = vmatprep.subr.mxu0 0.0
      %715 = vmatpush1.msra.mxu0 0.0
      %716 = vmatprep.subr.mxu0 0.0
      %717 = vmatpush1.msra.mxu0 0.0
      %718 = vmatprep.subr.mxu0 0.0
      %719 = vmatpush1.msra.mxu0 0.0
      %720 = vmatprep.subr.mxu0 0.0
      %721 = vmatpush1.msra.mxu0 0.0
      %722 = vmatprep.subr.mxu0 0.0
      %723 = vmatpush1.msra.mxu0 0.0
      %724 = vmatprep.subr.mxu0 0.0
      %725 = vmatpush1.msra.mxu0 0.0
      %726 = vmatprep.subr.mxu0 0.0
      %727 = vmatpush1.msra.mxu0 0.0
      %728 = vmatprep.subr.mxu0 0.0
      %729 = vmatpush1.msra.mxu0 0.0
      %730 = vmatprep.subr.mxu0 0.0
      %731 = vmatpush1.msra.mxu0 0.0
      %732 = vmatprep.subr.mxu0 0.0
      %733 = vmatpush1.msra.mxu0 0.0
      %734 = vmatprep.subr.mxu0 0.0
      %735 = vmatpush1.msra.mxu0 0.0
      %736 = vmatprep.subr.mxu0 0.0
      %737 = vmatpush1.msra.mxu0 0.0
      %738 = vmatprep.subr.mxu0 0.0
      %739 = vmatpush1.msra.mxu0 0.0
      %740 = vmatprep.subr.mxu0 0.0
      %741 = vmatpush1.msra.mxu0 0.0
      %742 = vmatprep.subr.mxu0 0.0
      %743 = vmatpush1.msra.mxu0 0.0
      %744 = vmatprep.subr.mxu0 0.0
      %745 = vmatpush1.msra.mxu0 0.0
      %746 = vmatprep.subr.mxu0 0.0
      %747 = vmatpush1.msra.mxu0 0.0
      %748 = vmatprep.subr.mxu0 0.0
      %749 = vmatpush1.msra.mxu0 0.0
      %750 = vmatprep.subr.mxu0 0.0
      %751 = vmatpush1.msra.mxu0 0.0
      %752 = vmatprep.subr.mxu0 0.0
      %753 = vmatpush1.msra.mxu0 0.0
      %754 = vmatprep.subr.mxu0 0.0
      %755 = vmatpush1.msra.mxu0 0.0
      %756 = vmatprep.subr.mxu0 0.0
      %757 = vmatpush1.msra.mxu0 0.0
      %758 = vmatprep.subr.mxu0 0.0
      %759 = vmatpush1.msra.mxu0 0.0
      %760 = vmatprep.subr.mxu0 0.0
      %761 = vmatpush1.msra.mxu0 0.0
      %762 = vmatprep.subr.mxu0 0.0
      %763 = vmatpush1.msra.mxu0 0.0
      %764 = vmatprep.subr.mxu0 0.0
      %765 = vmatpush1.msra.mxu0 0.0
      %766 = vmatprep.mubr.f32.mxu0 0.0
      %767 = vmatmul.mubr.f32.gmra.mrb[0].mxu0 %v700
      %v768 = vpop.f32.mrb[0].mxu0
      %v769 = vadd.f32 0.0, %v768
      %v770 = vpop.f32.mrb[0].mxu0
      %v771 = vadd.f32 0.0, %v770
      %772 = vdwg.mxu0
      %v774 = vsel %vm492, %v695, 0
      %776 = vmatprep.subr.mxu0 %v487
      %777 = vmatpush1.msra.mxu0 %v486
      %778 = vmatprep.subr.mxu0 0.0
      %779 = vmatpush1.msra.mxu0 0.0
      %780 = vmatprep.subr.mxu0 0.0
      %781 = vmatpush1.msra.mxu0 0.0
      %782 = vmatprep.subr.mxu0 0.0
      %783 = vmatpush1.msra.mxu0 0.0
      %784 = vmatprep.subr.mxu0 0.0
      %785 = vmatpush1.msra.mxu0 0.0
      %786 = vmatprep.subr.mxu0 0.0
      %787 = vmatpush1.msra.mxu0 0.0
      %788 = vmatprep.subr.mxu0 0.0
      %789 = vmatpush1.msra.mxu0 0.0
      %790 = vmatprep.subr.mxu0 0.0
      %791 = vmatpush1.msra.mxu0 0.0
      %792 = vmatprep.subr.mxu0 0.0
      %793 = vmatpush1.msra.mxu0 0.0
      %794 = vmatprep.subr.mxu0 0.0
      %795 = vmatpush1.msra.mxu0 0.0
      %796 = vmatprep.subr.mxu0 0.0
      %797 = vmatpush1.msra.mxu0 0.0
      %798 = vmatprep.subr.mxu0 0.0
      %799 = vmatpush1.msra.mxu0 0.0
      %800 = vmatprep.subr.mxu0 0.0
      %801 = vmatpush1.msra.mxu0 0.0
      %802 = vmatprep.subr.mxu0 0.0
      %803 = vmatpush1.msra.mxu0 0.0
      %804 = vmatprep.subr.mxu0 0.0
      %805 = vmatpush1.msra.mxu0 0.0
      %806 = vmatprep.subr.mxu0 0.0
      %807 = vmatpush1.msra.mxu0 0.0
      %808 = vmatprep.subr.mxu0 0.0
      %809 = vmatpush1.msra.mxu0 0.0
      %810 = vmatprep.subr.mxu0 0.0
      %811 = vmatpush1.msra.mxu0 0.0
      %812 = vmatprep.subr.mxu0 0.0
      %813 = vmatpush1.msra.mxu0 0.0
      %814 = vmatprep.subr.mxu0 0.0
      %815 = vmatpush1.msra.mxu0 0.0
      %816 = vmatprep.subr.mxu0 0.0
      %817 = vmatpush1.msra.mxu0 0.0
      %818 = vmatprep.subr.mxu0 0.0
      %819 = vmatpush1.msra.mxu0 0.0
      %820 = vmatprep.subr.mxu0 0.0
      %821 = vmatpush1.msra.mxu0 0.0
      %822 = vmatprep.subr.mxu0 0.0
      %823 = vmatpush1.msra.mxu0 0.0
      %824 = vmatprep.subr.mxu0 0.0
      %825 = vmatpush1.msra.mxu0 0.0
      %826 = vmatprep.subr.mxu0 0.0
      %827 = vmatpush1.msra.mxu0 0.0
      %828 = vmatprep.subr.mxu0 0.0
      %829 = vmatpush1.msra.mxu0 0.0
      %830 = vmatprep.subr.mxu0 0.0
      %831 = vmatpush1.msra.mxu0 0.0
      %832 = vmatprep.subr.mxu0 0.0
      %833 = vmatpush1.msra.mxu0 0.0
      %834 = vmatprep.subr.mxu0 0.0
      %835 = vmatpush1.msra.mxu0 0.0
      %836 = vmatprep.subr.mxu0 0.0
      %837 = vmatpush1.msra.mxu0 0.0
      %838 = vmatprep.subr.mxu0 0.0
      %839 = vmatpush1.msra.mxu0 0.0
      %840 = vmatprep.mubr.f32.mxu0 0.0
      %841 = vmatmul.mubr.f32.gmra.mrb[0].mxu0 %v774
      %v842 = vpop.f32.mrb[0].mxu0
      %v843 = vadd.f32 %v769, %v842
      %v844 = vpop.f32.mrb[0].mxu0
      %v845 = vadd.f32 %v771, %v844
      %846 = vdwg.mxu0
      %v847 = vld [vmem:[%s9] sm:$0xff]
      %849 = vset.pattern.permute.xlu0 0
      %850 = vperm.xlu0 %849, %v847
      %v851 = vpop.permute.xlu0 %850
      %v853 = vadd.f32 %v843, %v851
      %v854 = vadd.f32 %v845, %v851
      %v855 = vmax.f32 %v853, 0.0
      %v856 = vmax.f32 %v854, 0.0
      %857 = vst [vmem:[%s475] sm:$0xff] %v855
      %858 = vst [vmem:[%s475 + $0x8] sm:$0xff] %v856
      %v861 = vcombine.low %v692, %v694
      %v863 = vunpack.c.l.s4 1966171168
      %v864 = vunpack.c.0.s8 %v863
      %v865 = vlaneseq
      %v866 = vshrl.u32 %v865, 7
      %v867 = vsub.s32 %v864, %v866
      %v868 = vrot.slane %v861, %v867
      %v870 = vunpack.c.l.s4 1966171168
      %v871 = vunpack.c.0.s8 %v870
      %v872 = vlaneseq
      %v873 = vshrl.u32 %v872, 7
      %v874 = vsub.s32 %v871, %v873
      %v875 = vrot.slane %v868, %v874
      %v877 = vlaneseq
      %vm878 = vcmp.ge.s32.totalorder %v877, 0
      %vm879 = vcmp.lt.s32.totalorder %v877, 256
      %vm880 = vmand %vm878, %vm879
      %881 = vst.msk [vmem:[%s484] sm:$0x3] %vm880, %v875
      %s882 = smul.u32 2, %s30
      %p883 = scmp.lt.s32.totalorder %s29, 1
      %s884 = scalar_select %p883, %s29, 1
      %p885 = scmp.lt.s32.totalorder %s882, 1
      %s886 = scalar_select %p885, %s882, 1
      %s887 = smul.addr %s884, 2
      %s888 = sadd.s32 %s886, %s887
      %s889 = smul.addr %s888, 8
      %s890 = scalar_lea.vmem %s10, %s889
      %s891 = smul.u32 2, %s30
      %p892 = scmp.lt.s32.totalorder %s29, 1
      %s893 = scalar_select %p892, %s29, 1
      %p894 = scmp.lt.s32.totalorder %s891, 1
      %s895 = scalar_select %p894, %s891, 1
      %s896 = smul.addr %s893, 2
      %s897 = sadd.s32 %s895, %s896
      %s898 = scalar_lea.vmem %s11, %s897
      // Predicated region
      $region61: #{gated_attention_forward.1} parent=59 // pred_check
        %p899 = pneg %p281
      $region62: #{gated_attention_forward.1} parent=59 // pred_check_branch
        %901 = sbr.rel (%p899) target = $region64
      $region63: #{gated_attention_forward.1} parent=59 // pred_region
        %s902 = smul.u32 2, %s30
      $region64: #{gated_attention_forward.1} parent=59 // pred_fallthru
        _
      // Predicated region
      $region65: #{gated_attention_forward.1} parent=59 // pred_check
        %p903 = pneg %p309
      $region66: #{gated_attention_forward.1} parent=59 // pred_check_branch
        %905 = sbr.rel (%p903) target = $region68
      $region67: #{gated_attention_forward.1} parent=59 // pred_region
        %s906 = smul.u32 2, %s30
      $region68: #{gated_attention_forward.1} parent=59 // pred_fallthru
        _
    $region60: #{gated_attention_forward.1} parent=5 // pred_fallthru
      _
    %p907 = scmp.le.s32.totalorder 2, %s20
    // Predicated region
    $region69: #{gated_attention_forward.1} parent=5 // pred_check
      %p908 = pneg %p907
    $region70: #{gated_attention_forward.1} parent=5 // pred_check_branch
      %910 = sbr.rel (%p908) target = $region72
    $region71: #{gated_attention_forward.1} parent=5 // pred_region
      %s911 = ssub.s32 %s20, 2
      // Predicated region
      $region73: #{gated_attention_forward.1} parent=71 // pred_check
        %p912 = pneg %p287
      $region74: #{gated_attention_forward.1} parent=71 // pred_check_branch
        %914 = sbr.rel (%p912) target = $region76
      $region75: #{gated_attention_forward.1} parent=71 // pred_region
        %s915 = smul.u32 2, %s32
        %p916 = scmp.lt.s32.totalorder %s31, 1
        %s917 = scalar_select %p916, %s31, 1
        %p918 = scmp.lt.s32.totalorder %s915, 1
        %s919 = scalar_select %p918, %s915, 1
        %s920 = smul.addr %s917, 2
        %s921 = sadd.s32 %s919, %s920
        %s922 = smul.addr %s921, 8
        %s923 = scalar_lea.vmem %s10, %s922
      $region76: #{gated_attention_forward.1} parent=71 // pred_fallthru
        _
      // Predicated region
      $region77: #{gated_attention_forward.1} parent=71 // pred_check
        %p924 = pneg %p315
      $region78: #{gated_attention_forward.1} parent=71 // pred_check_branch
        %926 = sbr.rel (%p924) target = $region80
      $region79: #{gated_attention_forward.1} parent=71 // pred_region
        %s927 = smul.u32 2, %s32
        %p928 = scmp.lt.s32.totalorder %s31, 1
        %s929 = scalar_select %p928, %s31, 1
        %p930 = scmp.lt.s32.totalorder %s927, 1
        %s931 = scalar_select %p930, %s927, 1
        %s932 = smul.addr %s929, 2
        %s933 = sadd.s32 %s931, %s932
        %s934 = scalar_lea.vmem %s11, %s933
      $region80: #{gated_attention_forward.1} parent=71 // pred_fallthru
        _
    $region72: #{gated_attention_forward.1} parent=5 // pred_fallthru
      _
  $region6: #{gated_attention_forward.1} parent=0 // loop_footer
    %s24 = sadd.s32 1, %s20
  $region7: #{gated_attention_forward.1} parent=0 // loop_footer_branch
    %19 = sbr.rel target = $region3
  $region8: #{gated_attention_forward.1} parent=0 // loop_exit
    _

</llo_original>
